<compile_context>
chip_gen: v6e
topology: v6e:2x2x1
jax: 0.10.0
libtpu: 0.0.40
codegen_flags: <defaults>
</compile_context>

<pallas_src>
import functools

import jax
import jax.numpy as jnp
from jax.experimental import pallas as pl
from jax.experimental.pallas import tpu as pltpu


def _sigmoid_via_tanh(x):
    # Mathematically identical to the logistic sigmoid; single EUP tanh push.
    return 0.5 * (jnp.tanh(0.5 * x) + 1.0)


def _lstm_tele_kernel(in_ref, p_ref, out_ref, *, D, H):
    """Single fused forward step.

    in_ref : (1, D + 4H)       packed [x | h0 | c0 | h1 | c1]
    p_ref  : (D + 4H + 3, W)   rows: [W_ih1^T ; W_hh1^T ; W_ih2^T ; W_hh2^T ;
                                      W_lin (padded) ; b1 ; b2 ; b_lin]
    out_ref: (2, W)            row 0 = g (padded), row 1 = [h0'|c0'|h1'|c1']
    """
    W = p_ref.shape[-1]
    G = 4 * H  # gate width

    # ---- Hoisted layer-2 recurrent half: depends only on kernel inputs. ----
    h1 = in_ref[:, D + 2 * H:D + 3 * H]
    c1 = in_ref[:, D + 3 * H:D + 4 * H]
    w_hh2 = p_ref[D + 2 * H:D + 3 * H, :G]
    b2 = p_ref[D + G + 1:D + G + 2, :G]
    pre2 = jnp.dot(h1, w_hh2, preferred_element_type=jnp.float32) + b2

    # ---- LSTM cell 1: gates = [x|h0] @ [W_ih1^T ; W_hh1^T] + b1. ----
    xh0 = in_ref[:, :D + H]                       # contiguous lane slice
    c0 = in_ref[:, D + H:D + 2 * H]
    w1 = p_ref[:D + H, :G]
    b1 = p_ref[D + G:D + G + 1, :G]
    gates1 = jnp.dot(xh0, w1, preferred_element_type=jnp.float32) + b1
    sig1 = _sigmoid_via_tanh(gates1)              # full-width, then slice
    tg1 = jnp.tanh(gates1)
    i1 = sig1[:, 0 * H:1 * H]
    f1 = sig1[:, 1 * H:2 * H]
    g1 = tg1[:, 2 * H:3 * H]
    o1 = sig1[:, 3 * H:4 * H]
    c0n = f1 * c0 + i1 * g1
    h0n = o1 * jnp.tanh(c0n)

    # ---- LSTM cell 2: only the h0' @ W_ih2 half is on the critical path. ----
    w_ih2 = p_ref[D + H:D + 2 * H, :G]
    gates2 = jnp.dot(h0n, w_ih2, preferred_element_type=jnp.float32) + pre2
    sig2 = _sigmoid_via_tanh(gates2)
    tg2 = jnp.tanh(gates2)
    i2 = sig2[:, 0 * H:1 * H]
    f2 = sig2[:, 1 * H:2 * H]
    g2 = tg2[:, 2 * H:3 * H]
    o2 = sig2[:, 3 * H:4 * H]
    c1n = f2 * c1 + i2 * g2
    h1n = o2 * jnp.tanh(c1n)

    # ---- Linear head (weights pre-padded to W lanes -> (1, W) result). ----
    w_lin = p_ref[D + 3 * H:D + 4 * H, :]
    b_lin = p_ref[D + G + 2:D + G + 3, :]
    g_row = jnp.dot(h1n, w_lin, preferred_element_type=jnp.float32) + b_lin

    state_row = jnp.concatenate([h0n, c0n, h1n, c1n], axis=-1)   # (1, 4H)
    if G < W:
        state_row = jnp.pad(state_row, ((0, 0), (0, W - G)))

    # One lane-dense (2, W) store -> single writeback DMA, unmasked vst.
    out_ref[...] = jnp.concatenate([g_row, state_row], axis=0)


@functools.partial(jax.jit, static_argnames=("out_dim",))
def lstm_tele_forward(dL_dU, dL_dV, hidden, cell, params, out_dim):
    """Mirrors LSTM_tele.forward.

    dL_dU, dL_dV: arbitrary-shape f32 gradients (flattened & concatenated).
    hidden, cell: (2, 1, H) f32 states.
    Returns (g[(O,O)], hidden_new[(2,1,H)], cell_new[(2,1,H)]).
    """
    H = hidden.shape[-1]
    D = dL_dU.size + dL_dV.size
    OO = out_dim * out_dim
    p = params["p"]
    W = p.shape[-1]
    assert p.shape[0] == D + 4 * H + 3, "parameter slab rows mismatch"
    assert 4 * H <= W and OO <= W

    x = jnp.concatenate(
        [jnp.reshape(dL_dU, (-1,)), jnp.reshape(dL_dV, (-1,))], axis=0
    )[None, :].astype(jnp.float32)                           # (1, D)

    # Single packed input slab [x | h0 | c0 | h1 | c1]  (1, D + 4H).
    in_slab = jnp.concatenate(
        [x, hidden[0], cell[0], hidden[1], cell[1]], axis=-1
    )

    vmem = pl.BlockSpec(memory_space=pltpu.MemorySpace.VMEM)

    out = pl.pallas_call(
        functools.partial(_lstm_tele_kernel, D=D, H=H),
        out_shape=jax.ShapeDtypeStruct((2, W), jnp.float32),
        in_specs=[vmem, vmem],
        out_specs=vmem,
    )(in_slab, p)

    g = jnp.reshape(out[0, :OO], (out_dim, out_dim))
    state = out[1:2]
    h0n = state[:, 0 * H:1 * H]
    c0n = state[:, 1 * H:2 * H]
    h1n = state[:, 2 * H:3 * H]
    c1n = state[:, 3 * H:4 * H]
    hidden_new = jnp.stack([h0n, h1n])
    cell_new = jnp.stack([c0n, c1n])
    return g, hidden_new, cell_new


def init_params(key, input_dim, H, out_dim):
    """Deterministic init matching torch.nn.LSTMCell / nn.Linear shapes
    (uniform(-1/sqrt(H), 1/sqrt(H))), stored pre-transposed and packed into a
    single (D + 4H + 3, W) slab (W = max(4H, ceil(OO/128)*128) lanes):

        rows [0      , D      )  : W_ih1^T   (D, 4H)
        rows [D      , D+H    )  : W_hh1^T   (H, 4H)
        rows [D+H    , D+2H   )  : W_ih2^T   (H, 4H)
        rows [D+2H   , D+3H   )  : W_hh2^T   (H, 4H)
        rows [D+3H   , D+4H   )  : W_lin^T   (H, OO) zero-padded to W lanes
        row   D+4H               : b1 = b_ih1 + b_hh1
        row   D+4H+1             : b2 = b_ih2 + b_hh2
        row   D+4H+2             : b_lin

    Gate order along the 4H axis follows torch.nn.LSTMCell: [i, f, g, o]."""
    ks = jax.random.split(key, 10)
    bound = 1.0 / float(H) ** 0.5

    def u(k, shape):
        return jax.random.uniform(k, shape, jnp.float32, -bound, bound)

    D = input_dim
    OO = out_dim * out_dim
    OO_pad = ((OO + 127) // 128) * 128
    W = max(4 * H, OO_pad)

    w_ih1 = u(ks[0], (D, 4 * H))
    w_hh1 = u(ks[1], (H, 4 * H))
    b1 = u(ks[2], (4 * H,)) + u(ks[3], (4 * H,))
    w_ih2 = u(ks[4], (H, 4 * H))
    w_hh2 = u(ks[5], (H, 4 * H))
    b2 = u(ks[6], (4 * H,)) + u(ks[7], (4 * H,))
    w_lin = u(ks[8], (H, OO))
    b_lin = u(ks[9], (OO,))

    p = jnp.zeros((D + 4 * H + 3, W), jnp.float32)
    p = p.at[0:D, :4 * H].set(w_ih1)
    p = p.at[D:D + H, :4 * H].set(w_hh1)
    p = p.at[D + H:D + 2 * H, :4 * H].set(w_ih2)
    p = p.at[D + 2 * H:D + 3 * H, :4 * H].set(w_hh2)
    p = p.at[D + 3 * H:D + 4 * H, :OO].set(w_lin)
    p = p.at[D + 4 * H, :4 * H].set(b1)
    p = p.at[D + 4 * H + 1, :4 * H].set(b2)
    p = p.at[D + 4 * H + 2, :OO].set(b_lin)
    return dict(p=p)


def _reference(dL_dU, dL_dV, hidden, cell, params, out_dim):
    """Pure-JAX reference of the PyTorch math (gate order i,f,g,o)."""
    H = hidden.shape[-1]
    D = dL_dU.size + dL_dV.size
    OO = out_dim * out_dim
    p = params["p"]

    w1 = p[0:D + H, :4 * H]
    w_ih2 = p[D + H:D + 2 * H, :4 * H]
    w_hh2 = p[D + 2 * H:D + 3 * H, :4 * H]
    w_lin = p[D + 3 * H:D + 4 * H, :OO]
    b1 = p[D + 4 * H:D + 4 * H + 1, :4 * H]
    b2 = p[D + 4 * H + 1:D + 4 * H + 2, :4 * H]
    b_lin = p[D + 4 * H + 2:D + 4 * H + 3, :OO]

    x = jnp.concatenate(
        [jnp.reshape(dL_dU, (-1,)), jnp.reshape(dL_dV, (-1,))], axis=0
    )[None, :]

    def cell_fn(xh, c, w, b):
        gates = xh @ w + b
        i, f, g, o = jnp.split(gates, 4, axis=-1)
        c_new = jax.nn.sigmoid(f) * c + jax.nn.sigmoid(i) * jnp.tanh(g)
        h_new = jax.nn.sigmoid(o) * jnp.tanh(c_new)
        return h_new, c_new

    h0, c0 = cell_fn(jnp.concatenate([x, hidden[0]], -1), cell[0], w1, b1)
    gates2 = h0 @ w_ih2 + hidden[1] @ w_hh2 + b2
    i, f, g_, o = jnp.split(gates2, 4, axis=-1)
    c1 = jax.nn.sigmoid(f) * cell[1] + jax.nn.sigmoid(i) * jnp.tanh(g_)
    h1 = jax.nn.sigmoid(o) * jnp.tanh(c1)
    g = (h1 @ w_lin + b_lin).reshape(out_dim, out_dim)
    return g, jnp.stack([h0, h1]), jnp.stack([c0, c1])


if __name__ == "__main__":
    # Small shapes implied by the module: two gradient tensors whose flattened
    # sizes sum to input_dim, batch of 1, two-layer LSTM state.
    U_SHAPE = (4, 8)               # flatten -> 32
    V_SHAPE = (4, 8)               # flatten -> 32
    INPUT_DIM = 4 * 8 + 4 * 8      # 64
    HIDDEN = 32                    # 4H = 128 -> lane-dense gates & state
    OUT_DIM = 8                    # O*O = 64, padded to 128 lanes in-kernel

    key = jax.random.PRNGKey(0)
    k_u, k_v, k_h, k_c, k_p = jax.random.split(key, 5)

    dL_dU = jax.random.normal(k_u, U_SHAPE, jnp.float32)
    dL_dV = jax.random.normal(k_v, V_SHAPE, jnp.float32)
    hidden = jax.random.normal(k_h, (2, 1, HIDDEN), jnp.float32)
    cell = jax.random.normal(k_c, (2, 1, HIDDEN), jnp.float32)

    params = init_params(k_p, INPUT_DIM, HIDDEN, OUT_DIM)

    g, h_new, c_new = lstm_tele_forward(dL_dU, dL_dV, hidden, cell, params,
                                        out_dim=OUT_DIM)
    jax.block_until_ready((g, h_new, c_new))

    # Correctness check against a pure-JAX reference of the PyTorch math.
    g_ref, h_ref, c_ref = _reference(dL_dU, dL_dV, hidden, cell, params,
                                     OUT_DIM)
    assert g.shape == (OUT_DIM, OUT_DIM)
    assert h_new.shape == (2, 1, HIDDEN) and c_new.shape == (2, 1, HIDDEN)
    assert jnp.allclose(g, g_ref, atol=1e-5, rtol=1e-5)
    assert jnp.allclose(h_new, h_ref, atol=1e-5, rtol=1e-5)
    assert jnp.allclose(c_new, c_ref, atol=1e-5, rtol=1e-5)

    print("KERNEL_OK")
</pallas_src>

<mosaic_0001>
module attributes {stable_mosaic.version = 11 : i64} {
  func.func @_lstm_tele_kernel(%arg0: memref<1x192xf32, #tpu.memory_space<vmem>>, %arg1: memref<195x128xf32, #tpu.memory_space<vmem>>, %arg2: memref<2x128xf32, #tpu.memory_space<vmem>>) attributes {dimension_semantics = [], scalar_prefetch = 0 : i64, scratch_operands = 0 : i64, tpu.core_type = #tpu.core_type<tc>} {
    %c0 = arith.constant 0 : index
    %c128 = arith.constant 128 : index
    %0 = vector.load %arg0[%c0, %c128] : memref<1x192xf32, #tpu.memory_space<vmem>>, vector<1x32xf32>
    %c0_0 = arith.constant 0 : index
    %c160 = arith.constant 160 : index
    %1 = vector.load %arg0[%c0_0, %c160] : memref<1x192xf32, #tpu.memory_space<vmem>>, vector<1x32xf32>
    %c128_1 = arith.constant 128 : index
    %c0_2 = arith.constant 0 : index
    %2 = vector.load %arg1[%c128_1, %c0_2] : memref<195x128xf32, #tpu.memory_space<vmem>>, vector<32x128xf32>
    %c193 = arith.constant 193 : index
    %c0_3 = arith.constant 0 : index
    %3 = vector.load %arg1[%c193, %c0_3] : memref<195x128xf32, #tpu.memory_space<vmem>>, vector<1x128xf32>
    %cst = arith.constant dense<0.000000e+00> : vector<1x128xf32>
    %4 = tpu.matmul %0, %2, %cst {dimension_numbers = #tpu.dot_dimension_numbers<[1], [0], [0], [1], [0, 0, 1, 1], [], []>} : vector<1x32xf32>, vector<32x128xf32>, vector<1x128xf32> -> vector<1x128xf32>
    %5 = arith.addf %4, %3 : vector<1x128xf32>
    %c0_4 = arith.constant 0 : index
    %c0_5 = arith.constant 0 : index
    %6 = vector.load %arg0[%c0_4, %c0_5] : memref<1x192xf32, #tpu.memory_space<vmem>>, vector<1x96xf32>
    %c0_6 = arith.constant 0 : index
    %c96 = arith.constant 96 : index
    %7 = vector.load %arg0[%c0_6, %c96] : memref<1x192xf32, #tpu.memory_space<vmem>>, vector<1x32xf32>
    %c0_7 = arith.constant 0 : index
    %c0_8 = arith.constant 0 : index
    %8 = vector.load %arg1[%c0_7, %c0_8] : memref<195x128xf32, #tpu.memory_space<vmem>>, vector<96x128xf32>
    %c192 = arith.constant 192 : index
    %c0_9 = arith.constant 0 : index
    %9 = vector.load %arg1[%c192, %c0_9] : memref<195x128xf32, #tpu.memory_space<vmem>>, vector<1x128xf32>
    %cst_10 = arith.constant dense<0.000000e+00> : vector<1x128xf32>
    %10 = tpu.matmul %6, %8, %cst_10 {dimension_numbers = #tpu.dot_dimension_numbers<[1], [0], [0], [1], [0, 0, 1, 1], [], []>} : vector<1x96xf32>, vector<96x128xf32>, vector<1x128xf32> -> vector<1x128xf32>
    %11 = arith.addf %10, %9 : vector<1x128xf32>
    %cst_11 = arith.constant 5.000000e-01 : f32
    %12 = vector.broadcast %cst_11 : f32 to vector<1x128xf32>
    %13 = arith.mulf %12, %11 : vector<1x128xf32>
    %14 = math.tanh %13 : vector<1x128xf32>
    %cst_12 = arith.constant 1.000000e+00 : f32
    %15 = vector.broadcast %cst_12 : f32 to vector<1x128xf32>
    %16 = arith.addf %14, %15 : vector<1x128xf32>
    %cst_13 = arith.constant 5.000000e-01 : f32
    %17 = vector.broadcast %cst_13 : f32 to vector<1x128xf32>
    %18 = arith.mulf %17, %16 : vector<1x128xf32>
    %19 = math.tanh %11 : vector<1x128xf32>
    %20 = vector.extract_strided_slice %18 {offsets = [0, 0], sizes = [1, 32], strides = [1, 1]} : vector<1x128xf32> to vector<1x32xf32>
    %21 = vector.extract_strided_slice %18 {offsets = [0, 32], sizes = [1, 32], strides = [1, 1]} : vector<1x128xf32> to vector<1x32xf32>
    %22 = vector.extract_strided_slice %19 {offsets = [0, 64], sizes = [1, 32], strides = [1, 1]} : vector<1x128xf32> to vector<1x32xf32>
    %23 = vector.extract_strided_slice %18 {offsets = [0, 96], sizes = [1, 32], strides = [1, 1]} : vector<1x128xf32> to vector<1x32xf32>
    %24 = arith.mulf %21, %7 : vector<1x32xf32>
    %25 = arith.mulf %20, %22 : vector<1x32xf32>
    %26 = arith.addf %24, %25 : vector<1x32xf32>
    %27 = math.tanh %26 : vector<1x32xf32>
    %28 = arith.mulf %23, %27 : vector<1x32xf32>
    %c96_14 = arith.constant 96 : index
    %c0_15 = arith.constant 0 : index
    %29 = vector.load %arg1[%c96_14, %c0_15] : memref<195x128xf32, #tpu.memory_space<vmem>>, vector<32x128xf32>
    %cst_16 = arith.constant dense<0.000000e+00> : vector<1x128xf32>
    %30 = tpu.matmul %28, %29, %cst_16 {dimension_numbers = #tpu.dot_dimension_numbers<[1], [0], [0], [1], [0, 0, 1, 1], [], []>} : vector<1x32xf32>, vector<32x128xf32>, vector<1x128xf32> -> vector<1x128xf32>
    %31 = arith.addf %30, %5 : vector<1x128xf32>
    %cst_17 = arith.constant 5.000000e-01 : f32
    %32 = vector.broadcast %cst_17 : f32 to vector<1x128xf32>
    %33 = arith.mulf %32, %31 : vector<1x128xf32>
    %34 = math.tanh %33 : vector<1x128xf32>
    %cst_18 = arith.constant 1.000000e+00 : f32
    %35 = vector.broadcast %cst_18 : f32 to vector<1x128xf32>
    %36 = arith.addf %34, %35 : vector<1x128xf32>
    %cst_19 = arith.constant 5.000000e-01 : f32
    %37 = vector.broadcast %cst_19 : f32 to vector<1x128xf32>
    %38 = arith.mulf %37, %36 : vector<1x128xf32>
    %39 = math.tanh %31 : vector<1x128xf32>
    %40 = vector.extract_strided_slice %38 {offsets = [0, 0], sizes = [1, 32], strides = [1, 1]} : vector<1x128xf32> to vector<1x32xf32>
    %41 = vector.extract_strided_slice %38 {offsets = [0, 32], sizes = [1, 32], strides = [1, 1]} : vector<1x128xf32> to vector<1x32xf32>
    %42 = vector.extract_strided_slice %39 {offsets = [0, 64], sizes = [1, 32], strides = [1, 1]} : vector<1x128xf32> to vector<1x32xf32>
    %43 = vector.extract_strided_slice %38 {offsets = [0, 96], sizes = [1, 32], strides = [1, 1]} : vector<1x128xf32> to vector<1x32xf32>
    %44 = arith.mulf %41, %1 : vector<1x32xf32>
    %45 = arith.mulf %40, %42 : vector<1x32xf32>
    %46 = arith.addf %44, %45 : vector<1x32xf32>
    %47 = math.tanh %46 : vector<1x32xf32>
    %48 = arith.mulf %43, %47 : vector<1x32xf32>
    %c160_20 = arith.constant 160 : index
    %c0_21 = arith.constant 0 : index
    %49 = vector.load %arg1[%c160_20, %c0_21] : memref<195x128xf32, #tpu.memory_space<vmem>>, vector<32x128xf32>
    %c194 = arith.constant 194 : index
    %c0_22 = arith.constant 0 : index
    %50 = vector.load %arg1[%c194, %c0_22] : memref<195x128xf32, #tpu.memory_space<vmem>>, vector<1x128xf32>
    %cst_23 = arith.constant dense<0.000000e+00> : vector<1x128xf32>
    %51 = tpu.matmul %48, %49, %cst_23 {dimension_numbers = #tpu.dot_dimension_numbers<[1], [0], [0], [1], [0, 0, 1, 1], [], []>} : vector<1x32xf32>, vector<32x128xf32>, vector<1x128xf32> -> vector<1x128xf32>
    %52 = arith.addf %51, %50 : vector<1x128xf32>
    %53 = tpu.concatenate %28, %26, %48, %46 in 1 : vector<1x32xf32>, vector<1x32xf32>, vector<1x32xf32>, vector<1x32xf32> -> vector<1x128xf32>
    %54 = tpu.concatenate %52, %53 in 0 : vector<1x128xf32>, vector<1x128xf32> -> vector<2x128xf32>
    %c0_24 = arith.constant 0 : index
    %c0_25 = arith.constant 0 : index
    %55 = vector.load %arg2[%c0_24, %c0_25] : memref<2x128xf32, #tpu.memory_space<vmem>>, vector<2x128xf32>
    tpu.vector_store %arg2[%c0_24, %c0_25], %54 {strides = array<i32>} : memref<2x128xf32, #tpu.memory_space<vmem>>, vector<2x128xf32>,
    return
  }
}

</mosaic_0001>

<llo_original>
// kernel: squeeze.9
$region0: #{squeeze.9}
  %s0 = inlined_call_operand.vmem [shape: f32[64], index: 0, kind: input, shape index: {}]
  %s1 = inlined_call_operand.hbm [shape: f32[8,8], index: 1, kind: output, shape index: {}]
  $region1: #{squeeze.9} parent=0
    #allocation0 [shape = 'u8[4096]{0}', space=vmem, size = 0x1000, scoped, tag = 'operand span for operand 1']
    #allocation1 [shape = 's32[1]{0}', space=sflag, size = 0x4, scoped, tag = 'scoped memory for squeeze.9']
    #allocation2 [shape = 'u8[4096]{0}', space=vmem, size = 0x1000, scoped, tag = 'scoped mem for input reshape']
    %2 = vsyncpa [#allocation1], 0
    %s4 = sshll.u32 1, 1
    %s5 = ssub.s32 %s4, 1
    %v6 = vld [vmem:[%s0] sm:%s5]
    %7 = vst [vmem:[#allocation2] sm:%s5] %v6
    %v8 = vld [vmem:[#allocation2] sm:$0x1]
    %vm9 = vcmask 64512
    %10 = vst.msk [vmem:[#allocation0] sm:$0x1] %vm9, %v8
    %v11 = vld [vmem:[#allocation2] sm:$0x1]
    %12 = vrot.lane.b32.xlu0 %v11, 120
    %v13 = vpop.permute.xlu0 %12
    %vm14 = vcmask 64512
    %s15 = scalar_lea.vmem [#allocation0], 1
    %16 = vst.msk [vmem:[%s15] sm:$0x1] %vm14, %v13
    %v17 = vld [vmem:[#allocation2] sm:$0x1]
    %18 = vrot.lane.b32.xlu0 %v17, 112
    %v19 = vpop.permute.xlu0 %18
    %vm20 = vcmask 64512
    %s21 = scalar_lea.vmem [#allocation0], 2
    %22 = vst.msk [vmem:[%s21] sm:$0x1] %vm20, %v19
    %v23 = vld [vmem:[#allocation2] sm:$0x1]
    %24 = vrot.lane.b32.xlu0 %v23, 104
    %v25 = vpop.permute.xlu0 %24
    %vm26 = vcmask 64512
    %s27 = scalar_lea.vmem [#allocation0], 3
    %28 = vst.msk [vmem:[%s27] sm:$0x1] %vm26, %v25
    %v29 = vld [vmem:[#allocation2] sm:$0x1]
    %30 = vrot.lane.b32.xlu0 %v29, 96
    %v31 = vpop.permute.xlu0 %30
    %vm32 = vcmask 64512
    %s33 = scalar_lea.vmem [#allocation0], 4
    %34 = vst.msk [vmem:[%s33] sm:$0x1] %vm32, %v31
    %v35 = vld [vmem:[#allocation2] sm:$0x1]
    %36 = vrot.lane.b32.xlu0 %v35, 88
    %v37 = vpop.permute.xlu0 %36
    %vm38 = vcmask 64512
    %s39 = scalar_lea.vmem [#allocation0], 5
    %40 = vst.msk [vmem:[%s39] sm:$0x1] %vm38, %v37
    %v41 = vld [vmem:[#allocation2] sm:$0x1]
    %42 = vrot.lane.b32.xlu0 %v41, 80
    %v43 = vpop.permute.xlu0 %42
    %vm44 = vcmask 64512
    %s45 = scalar_lea.vmem [#allocation0], 6
    %46 = vst.msk [vmem:[%s45] sm:$0x1] %vm44, %v43
    %v47 = vld [vmem:[#allocation2] sm:$0x1]
    %48 = vrot.lane.b32.xlu0 %v47, 72
    %v49 = vpop.permute.xlu0 %48
    %vm50 = vcmask 64512
    %s51 = scalar_lea.vmem [#allocation0], 7
    %52 = vst.msk [vmem:[%s51] sm:$0x1] %vm50, %v49
    %s54 = ssub.s32 128, 128
    %55 = vsyncadd [#allocation1], %s54
    %s57 = sshll.u32 [#allocation0], 4
    %s58 = int_to_ptr.vmem [resolvable:$true] %s57
    %60 = dma.vmem_to_hbm [thread:$0]  %s58, 128, %s1, [#allocation1]
    %61 = dma.done [#allocation1], 128
    %62 = vsyncpa [#allocation1], 1

// kernel: lstm_tele_forward.1
$region0: #{lstm_tele_forward.1}
  #allocation0 [shape = 'u32[]', space=smem, size = 0x4, offset = 0x4, fixed_abs, tag = 'smem constant byte address 0x4 - core index']
  #allocation1 [shape = 'u32[144,128]{1,0:T(1,128)}', space=vmem, size = 0x12000, scoped, tag = 'internal scratch']
  %s0 = inlined_call_operand.vmem [shape: f32[1,192], index: 0, kind: input, shape index: {}]
  %s1 = inlined_call_operand.hbm [shape: f32[195,128], index: 1, kind: input, shape index: {}]
  %s2 = inlined_call_operand.vmem [shape: f32[2,128], index: 2, kind: output, shape index: {}]
  %s3 = sld [smem:[#allocation0]]
  $region22: #{lstm_tele_forward.1} parent=0
    _
  %s5 = ssub.s32 1, %s3
  %s6 = scalar_select 0, %s5, %s3
  $region1: #{lstm_tele_forward.1} parent=0
    #allocation2 [shape = 'u8[102400]{0}', space=vmem, size = 0x19000, scoped, tag = 'input window, operand 1, single buffered']
    #allocation3 [shape = 's32[1]{0}', space=sflag, size = 0x4, scoped, tag = 'scoped memory for lstm_tele_forward.1']
    %7 = vsyncpa [#allocation3], 0
    // Predicated region
    $region2: #{lstm_tele_forward.1} parent=1 // pred_check
      _
    $region3: #{lstm_tele_forward.1} parent=1 // pred_check_branch
      %9 = sbr.rel (0) target = $region5
    $region4: #{lstm_tele_forward.1} parent=1 // pred_region
      _
    $region5: #{lstm_tele_forward.1} parent=1 // pred_fallthru
      _
    // Predicated region
    $region6: #{lstm_tele_forward.1} parent=1 // pred_check
      _
    $region7: #{lstm_tele_forward.1} parent=1 // pred_check_branch
      %11 = sbr.rel (0) target = $region9
    $region8: #{lstm_tele_forward.1} parent=1 // pred_region
      %s13 = ssub.s32 3200, 3200
      %14 = vsyncadd [#allocation3], %s13
      %s15 = sshll.u32 [#allocation2], 4
      %s16 = int_to_ptr.vmem [resolvable:$true] %s15
      %21 = dma.hbm_to_vmem [thread:$0]  %s1, 3200, %s16, [#allocation3], 128, 128, 8
    $region9: #{lstm_tele_forward.1} parent=1 // pred_fallthru
      _
    // Predicated region
    $region10: #{lstm_tele_forward.1} parent=1 // pred_check
      _
    $region11: #{lstm_tele_forward.1} parent=1 // pred_check_branch
      %23 = sbr.rel (0) target = $region13
    $region12: #{lstm_tele_forward.1} parent=1 // pred_region
      %24 = dma.done [#allocation3], 3200
    $region13: #{lstm_tele_forward.1} parent=1 // pred_fallthru
      _
    %v25 = vld [vmem:[%s0 + $0x1] sm:$0x1]
    %v26 = vld [vmem:[#allocation2 + $0x80] sm:$0xff]
    %v27 = vld [vmem:[#allocation2 + $0x88] sm:$0xff]
    %v28 = vld [vmem:[#allocation2 + $0x90] sm:$0xff]
    %v29 = vld [vmem:[#allocation2 + $0x98] sm:$0xff]
    %v30 = vld [vmem:[#allocation2 + $0xc1] sm:$0x1]
    %vm31 = vcmask 261120
    %v33 = vsel %vm31, %v25, 0
    %35 = vmatprep.subr.mxu0 0.0
    %36 = vmatpush1.msra.mxu0 0.0
    %37 = vmatprep.subr.mxu0 0.0
    %38 = vmatpush1.msra.mxu0 0.0
    %39 = vmatprep.subr.mxu0 0.0
    %40 = vmatpush1.msra.mxu0 0.0
    %41 = vmatprep.subr.mxu0 0.0
    %42 = vmatpush1.msra.mxu0 0.0
    %43 = vmatprep.subr.mxu0 0.0
    %44 = vmatpush1.msra.mxu0 0.0
    %45 = vmatprep.subr.mxu0 0.0
    %46 = vmatpush1.msra.mxu0 0.0
    %47 = vmatprep.subr.mxu0 0.0
    %48 = vmatpush1.msra.mxu0 0.0
    %49 = vmatprep.subr.mxu0 0.0
    %50 = vmatpush1.msra.mxu0 0.0
    %51 = vmatprep.subr.mxu0 0.0
    %52 = vmatpush1.msra.mxu0 0.0
    %53 = vmatprep.subr.mxu0 0.0
    %54 = vmatpush1.msra.mxu0 0.0
    %55 = vmatprep.subr.mxu0 0.0
    %56 = vmatpush1.msra.mxu0 0.0
    %57 = vmatprep.subr.mxu0 0.0
    %58 = vmatpush1.msra.mxu0 0.0
    %59 = vmatprep.subr.mxu0 0.0
    %60 = vmatpush1.msra.mxu0 %v29
    %61 = vmatprep.subr.mxu0 0.0
    %62 = vmatpush1.msra.mxu0 %v28
    %63 = vmatprep.subr.mxu0 0.0
    %64 = vmatpush1.msra.mxu0 %v27
    %65 = vmatprep.subr.mxu0 0.0
    %66 = vmatpush1.msra.mxu0 %v26
    %67 = vmatprep.subr.mxu0 0.0
    %68 = vmatpush2.msra.mxu0 0.0
    %69 = vmatprep.subr.mxu0 0.0
    %70 = vmatpush2.msra.mxu0 0.0
    %71 = vmatprep.subr.mxu0 0.0
    %72 = vmatpush2.msra.mxu0 0.0
    %73 = vmatprep.subr.mxu0 0.0
    %74 = vmatpush2.msra.mxu0 0.0
    %75 = vmatprep.subr.mxu0 0.0
    %76 = vmatpush2.msra.mxu0 0.0
    %77 = vmatprep.subr.mxu0 0.0
    %78 = vmatpush2.msra.mxu0 0.0
    %79 = vmatprep.subr.mxu0 0.0
    %80 = vmatpush2.msra.mxu0 0.0
    %81 = vmatprep.subr.mxu0 0.0
    %82 = vmatpush2.msra.mxu0 0.0
    %83 = vmatprep.subr.mxu0 0.0
    %84 = vmatpush2.msra.mxu0 0.0
    %85 = vmatprep.subr.mxu0 0.0
    %86 = vmatpush2.msra.mxu0 0.0
    %87 = vmatprep.subr.mxu0 0.0
    %88 = vmatpush2.msra.mxu0 0.0
    %89 = vmatprep.subr.mxu0 0.0
    %90 = vmatpush2.msra.mxu0 0.0
    %91 = vmatprep.subr.mxu0 0.0
    %92 = vmatpush2.msra.mxu0 0.0
    %93 = vmatprep.subr.mxu0 0.0
    %94 = vmatpush2.msra.mxu0 0.0
    %95 = vmatprep.subr.mxu0 0.0
    %96 = vmatpush2.msra.mxu0 0.0
    %97 = vmatprep.subr.mxu0 0.0
    %98 = vmatpush2.msra.mxu0 0.0
    %99 = vmatprep.mubr.f32.mxu0 0.0
    %100 = vmatmul.mubr.f32.gmra.mxu0 %v33
    %v101 = vpop.f32.mrf.mxu0
    %v102 = vadd.f32 %v30, %v101
    %v103 = vpop.f32.mrf.mxu0
    %104 = vdwg.mxu0
    %v105 = vld [vmem:[%s0] sm:$0x1]
    %v106 = vld [vmem:[#allocation2] sm:$0xff]
    %v107 = vld [vmem:[#allocation2 + $0x8] sm:$0xff]
    %v108 = vld [vmem:[#allocation2 + $0x10] sm:$0xff]
    %v109 = vld [vmem:[#allocation2 + $0x18] sm:$0xff]
    %v110 = vld [vmem:[#allocation2 + $0x20] sm:$0xff]
    %v111 = vld [vmem:[#allocation2 + $0x28] sm:$0xff]
    %v112 = vld [vmem:[#allocation2 + $0x30] sm:$0xff]
    %v113 = vld [vmem:[#allocation2 + $0x38] sm:$0xff]
    %v114 = vld [vmem:[#allocation2 + $0x40] sm:$0xff]
    %v115 = vld [vmem:[#allocation2 + $0x48] sm:$0xff]
    %v116 = vld [vmem:[#allocation2 + $0x50] sm:$0xff]
    %v117 = vld [vmem:[#allocation2 + $0x58] sm:$0xff]
    %v118 = vld [vmem:[#allocation2 + $0xc0] sm:$0x1]
    %vm119 = vcmask 785408
    %v121 = vsel %vm119, %v105, 0
    %123 = vmatprep.subr.mxu0 0.0
    %124 = vmatpush1.msra.mxu0 0.0
    %125 = vmatprep.subr.mxu0 0.0
    %126 = vmatpush1.msra.mxu0 0.0
    %127 = vmatprep.subr.mxu0 0.0
    %128 = vmatpush1.msra.mxu0 0.0
    %129 = vmatprep.subr.mxu0 0.0
    %130 = vmatpush1.msra.mxu0 0.0
    %131 = vmatprep.subr.mxu0 0.0
    %132 = vmatpush1.msra.mxu0 %v117
    %133 = vmatprep.subr.mxu0 0.0
    %134 = vmatpush1.msra.mxu0 %v116
    %135 = vmatprep.subr.mxu0 0.0
    %136 = vmatpush1.msra.mxu0 %v115
    %137 = vmatprep.subr.mxu0 0.0
    %138 = vmatpush1.msra.mxu0 %v114
    %139 = vmatprep.subr.mxu0 0.0
    %140 = vmatpush1.msra.mxu0 %v113
    %141 = vmatprep.subr.mxu0 0.0
    %142 = vmatpush1.msra.mxu0 %v112
    %143 = vmatprep.subr.mxu0 0.0
    %144 = vmatpush1.msra.mxu0 %v111
    %145 = vmatprep.subr.mxu0 0.0
    %146 = vmatpush1.msra.mxu0 %v110
    %147 = vmatprep.subr.mxu0 0.0
    %148 = vmatpush1.msra.mxu0 %v109
    %149 = vmatprep.subr.mxu0 0.0
    %150 = vmatpush1.msra.mxu0 %v108
    %151 = vmatprep.subr.mxu0 0.0
    %152 = vmatpush1.msra.mxu0 %v107
    %153 = vmatprep.subr.mxu0 0.0
    %154 = vmatpush1.msra.mxu0 %v106
    %155 = vmatprep.subr.mxu0 0.0
    %156 = vmatpush2.msra.mxu0 0.0
    %157 = vmatprep.subr.mxu0 0.0
    %158 = vmatpush2.msra.mxu0 0.0
    %159 = vmatprep.subr.mxu0 0.0
    %160 = vmatpush2.msra.mxu0 0.0
    %161 = vmatprep.subr.mxu0 0.0
    %162 = vmatpush2.msra.mxu0 0.0
    %163 = vmatprep.subr.mxu0 0.0
    %164 = vmatpush2.msra.mxu0 0.0
    %165 = vmatprep.subr.mxu0 0.0
    %166 = vmatpush2.msra.mxu0 0.0
    %167 = vmatprep.subr.mxu0 0.0
    %168 = vmatpush2.msra.mxu0 0.0
    %169 = vmatprep.subr.mxu0 0.0
    %170 = vmatpush2.msra.mxu0 0.0
    %171 = vmatprep.subr.mxu0 0.0
    %172 = vmatpush2.msra.mxu0 0.0
    %173 = vmatprep.subr.mxu0 0.0
    %174 = vmatpush2.msra.mxu0 0.0
    %175 = vmatprep.subr.mxu0 0.0
    %176 = vmatpush2.msra.mxu0 0.0
    %177 = vmatprep.subr.mxu0 0.0
    %178 = vmatpush2.msra.mxu0 0.0
    %179 = vmatprep.subr.mxu0 0.0
    %180 = vmatpush2.msra.mxu0 0.0
    %181 = vmatprep.subr.mxu0 0.0
    %182 = vmatpush2.msra.mxu0 0.0
    %183 = vmatprep.subr.mxu0 0.0
    %184 = vmatpush2.msra.mxu0 0.0
    %185 = vmatprep.subr.mxu0 0.0
    %186 = vmatpush2.msra.mxu0 0.0
    %187 = vmatprep.mubr.f32.mxu0 0.0
    %188 = vmatmul.mubr.f32.gmra.mxu0 %v121
    %v189 = vpop.f32.mrf.mxu0
    %v190 = vadd.f32 %v118, %v189
    %v191 = vpop.f32.mrf.mxu0
    %192 = vdwg.mxu0
    %v193 = vmul.f32 %v190, 0.5
    %v194 = vtanh.pop %v193
    %v195 = vadd.f32 %v194, 1.0
    %v196 = vmul.f32 %v195, 0.5
    %v197 = vtanh.pop %v190
    %v198 = vlaneseq
    %v199 = vshrl.u32 %v198, 7
    %v200 = vsub.s32 0, %v199
    %v201 = vrot.slane %v105, %v200
    %202 = vrot.lane.b32.xlu0 %v201, 64
    %v203 = vpop.permute.xlu0 %202
    %v205 = vmul.f32 %v196, %v203
    %207 = vrot.lane.b32.xlu0 %v197, 64
    %v208 = vpop.permute.xlu0 %207
    %v210 = vmul.f32 %v196, %v208
    %212 = vrot.lane.b32.xlu0 %v210, 32
    %v213 = vpop.permute.xlu0 %212
    %v215 = vadd.f32 %v205, %v213
    %v216 = vtanh.pop %v215
    %218 = vrot.lane.b32.xlu0 %v216, 64
    %v219 = vpop.permute.xlu0 %218
    %v221 = vmul.f32 %v196, %v219
    %v222 = vld [vmem:[#allocation2 + $0x60] sm:$0xff]
    %v223 = vld [vmem:[#allocation2 + $0x68] sm:$0xff]
    %v224 = vld [vmem:[#allocation2 + $0x70] sm:$0xff]
    %v225 = vld [vmem:[#allocation2 + $0x78] sm:$0xff]
    %227 = vrot.lane.b32.xlu0 %v221, 32
    %v228 = vpop.permute.xlu0 %227
    %v229 = vsel %vm31, %v228, 0
    %231 = vmatprep.subr.mxu0 0.0
    %232 = vmatpush1.msra.mxu0 0.0
    %233 = vmatprep.subr.mxu0 0.0
    %234 = vmatpush1.msra.mxu0 0.0
    %235 = vmatprep.subr.mxu0 0.0
    %236 = vmatpush1.msra.mxu0 0.0
    %237 = vmatprep.subr.mxu0 0.0
    %238 = vmatpush1.msra.mxu0 0.0
    %239 = vmatprep.subr.mxu0 0.0
    %240 = vmatpush1.msra.mxu0 0.0
    %241 = vmatprep.subr.mxu0 0.0
    %242 = vmatpush1.msra.mxu0 0.0
    %243 = vmatprep.subr.mxu0 0.0
    %244 = vmatpush1.msra.mxu0 0.0
    %245 = vmatprep.subr.mxu0 0.0
    %246 = vmatpush1.msra.mxu0 0.0
    %247 = vmatprep.subr.mxu0 0.0
    %248 = vmatpush1.msra.mxu0 0.0
    %249 = vmatprep.subr.mxu0 0.0
    %250 = vmatpush1.msra.mxu0 0.0
    %251 = vmatprep.subr.mxu0 0.0
    %252 = vmatpush1.msra.mxu0 0.0
    %253 = vmatprep.subr.mxu0 0.0
    %254 = vmatpush1.msra.mxu0 0.0
    %255 = vmatprep.subr.mxu0 0.0
    %256 = vmatpush1.msra.mxu0 %v225
    %257 = vmatprep.subr.mxu0 0.0
    %258 = vmatpush1.msra.mxu0 %v224
    %259 = vmatprep.subr.mxu0 0.0
    %260 = vmatpush1.msra.mxu0 %v223
    %261 = vmatprep.subr.mxu0 0.0
    %262 = vmatpush1.msra.mxu0 %v222
    %263 = vmatprep.subr.mxu0 0.0
    %264 = vmatpush2.msra.mxu0 0.0
    %265 = vmatprep.subr.mxu0 0.0
    %266 = vmatpush2.msra.mxu0 0.0
    %267 = vmatprep.subr.mxu0 0.0
    %268 = vmatpush2.msra.mxu0 0.0
    %269 = vmatprep.subr.mxu0 0.0
    %270 = vmatpush2.msra.mxu0 0.0
    %271 = vmatprep.subr.mxu0 0.0
    %272 = vmatpush2.msra.mxu0 0.0
    %273 = vmatprep.subr.mxu0 0.0
    %274 = vmatpush2.msra.mxu0 0.0
    %275 = vmatprep.subr.mxu0 0.0
    %276 = vmatpush2.msra.mxu0 0.0
    %277 = vmatprep.subr.mxu0 0.0
    %278 = vmatpush2.msra.mxu0 0.0
    %279 = vmatprep.subr.mxu0 0.0
    %280 = vmatpush2.msra.mxu0 0.0
    %281 = vmatprep.subr.mxu0 0.0
    %282 = vmatpush2.msra.mxu0 0.0
    %283 = vmatprep.subr.mxu0 0.0
    %284 = vmatpush2.msra.mxu0 0.0
    %285 = vmatprep.subr.mxu0 0.0
    %286 = vmatpush2.msra.mxu0 0.0
    %287 = vmatprep.subr.mxu0 0.0
    %288 = vmatpush2.msra.mxu0 0.0
    %289 = vmatprep.subr.mxu0 0.0
    %290 = vmatpush2.msra.mxu0 0.0
    %291 = vmatprep.subr.mxu0 0.0
    %292 = vmatpush2.msra.mxu0 0.0
    %293 = vmatprep.subr.mxu0 0.0
    %294 = vmatpush2.msra.mxu0 0.0
    %295 = vmatprep.mubr.f32.mxu0 0.0
    %296 = vmatmul.mubr.f32.gmra.mxu0 %v229
    %v297 = vpop.f32.mrf.mxu0
    %v298 = vadd.f32 %v102, %v297
    %v299 = vpop.f32.mrf.mxu0
    %300 = vdwg.mxu0
    %v301 = vmul.f32 %v298, 0.5
    %v302 = vtanh.pop %v301
    %v303 = vadd.f32 %v302, 1.0
    %v304 = vmul.f32 %v303, 0.5
    %v305 = vtanh.pop %v298
    %v306 = vmul.f32 %v304, %v25
    %308 = vrot.lane.b32.xlu0 %v305, 64
    %v309 = vpop.permute.xlu0 %308
    %v311 = vmul.f32 %v304, %v309
    %313 = vrot.lane.b32.xlu0 %v311, 32
    %v314 = vpop.permute.xlu0 %313
    %v316 = vadd.f32 %v306, %v314
    %v317 = vtanh.pop %v316
    %319 = vrot.lane.b32.xlu0 %v317, 64
    %v320 = vpop.permute.xlu0 %319
    %v322 = vmul.f32 %v304, %v320
    %v323 = vld [vmem:[#allocation2 + $0xa0] sm:$0xff]
    %v324 = vld [vmem:[#allocation2 + $0xa8] sm:$0xff]
    %v325 = vld [vmem:[#allocation2 + $0xb0] sm:$0xff]
    %v326 = vld [vmem:[#allocation2 + $0xb8] sm:$0xff]
    %v327 = vld [vmem:[#allocation2 + $0xc2] sm:$0x1]
    %329 = vrot.lane.b32.xlu0 %v322, 32
    %v330 = vpop.permute.xlu0 %329
    %v331 = vsel %vm31, %v330, 0
    %333 = vmatprep.subr.mxu0 0.0
    %334 = vmatpush1.msra.mxu0 0.0
    %335 = vmatprep.subr.mxu0 0.0
    %336 = vmatpush1.msra.mxu0 0.0
    %337 = vmatprep.subr.mxu0 0.0
    %338 = vmatpush1.msra.mxu0 0.0
    %339 = vmatprep.subr.mxu0 0.0
    %340 = vmatpush1.msra.mxu0 0.0
    %341 = vmatprep.subr.mxu0 0.0
    %342 = vmatpush1.msra.mxu0 0.0
    %343 = vmatprep.subr.mxu0 0.0
    %344 = vmatpush1.msra.mxu0 0.0
    %345 = vmatprep.subr.mxu0 0.0
    %346 = vmatpush1.msra.mxu0 0.0
    %347 = vmatprep.subr.mxu0 0.0
    %348 = vmatpush1.msra.mxu0 0.0
    %349 = vmatprep.subr.mxu0 0.0
    %350 = vmatpush1.msra.mxu0 0.0
    %351 = vmatprep.subr.mxu0 0.0
    %352 = vmatpush1.msra.mxu0 0.0
    %353 = vmatprep.subr.mxu0 0.0
    %354 = vmatpush1.msra.mxu0 0.0
    %355 = vmatprep.subr.mxu0 0.0
    %356 = vmatpush1.msra.mxu0 0.0
    %357 = vmatprep.subr.mxu0 0.0
    %358 = vmatpush1.msra.mxu0 %v326
    %359 = vmatprep.subr.mxu0 0.0
    %360 = vmatpush1.msra.mxu0 %v325
    %361 = vmatprep.subr.mxu0 0.0
    %362 = vmatpush1.msra.mxu0 %v324
    %363 = vmatprep.subr.mxu0 0.0
    %364 = vmatpush1.msra.mxu0 %v323
    %365 = vmatprep.subr.mxu0 0.0
    %366 = vmatpush2.msra.mxu0 0.0
    %367 = vmatprep.subr.mxu0 0.0
    %368 = vmatpush2.msra.mxu0 0.0
    %369 = vmatprep.subr.mxu0 0.0
    %370 = vmatpush2.msra.mxu0 0.0
    %371 = vmatprep.subr.mxu0 0.0
    %372 = vmatpush2.msra.mxu0 0.0
    %373 = vmatprep.subr.mxu0 0.0
    %374 = vmatpush2.msra.mxu0 0.0
    %375 = vmatprep.subr.mxu0 0.0
    %376 = vmatpush2.msra.mxu0 0.0
    %377 = vmatprep.subr.mxu0 0.0
    %378 = vmatpush2.msra.mxu0 0.0
    %379 = vmatprep.subr.mxu0 0.0
    %380 = vmatpush2.msra.mxu0 0.0
    %381 = vmatprep.subr.mxu0 0.0
    %382 = vmatpush2.msra.mxu0 0.0
    %383 = vmatprep.subr.mxu0 0.0
    %384 = vmatpush2.msra.mxu0 0.0
    %385 = vmatprep.subr.mxu0 0.0
    %386 = vmatpush2.msra.mxu0 0.0
    %387 = vmatprep.subr.mxu0 0.0
    %388 = vmatpush2.msra.mxu0 0.0
    %389 = vmatprep.subr.mxu0 0.0
    %390 = vmatpush2.msra.mxu0 0.0
    %391 = vmatprep.subr.mxu0 0.0
    %392 = vmatpush2.msra.mxu0 0.0
    %393 = vmatprep.subr.mxu0 0.0
    %394 = vmatpush2.msra.mxu0 0.0
    %395 = vmatprep.subr.mxu0 0.0
    %396 = vmatpush2.msra.mxu0 0.0
    %397 = vmatprep.mubr.f32.mxu0 0.0
    %398 = vmatmul.mubr.f32.gmra.mxu0 %v331
    %v399 = vpop.f32.mrf.mxu0
    %v400 = vadd.f32 %v327, %v399
    %v401 = vpop.f32.mrf.mxu0
    %402 = vdwg.mxu0
    %404 = vrot.lane.b32.xlu0 %v322, 96
    %v405 = vpop.permute.xlu0 %404
    %408 = vrot.lane.b32.xlu0 %v316, 64
    %v409 = vpop.permute.xlu0 %408
    %v411 = vsel %vm31, %v228, %v215
    %vm412 = vcmask 523264
    %v413 = vsel %vm412, %v411, %v405
    %v414 = vsel %vm119, %v413, %v409
    %v416 = vrot.slane %v414, 7
    %vm418 = vcmask 1040384
    %v419 = vsel %vm418, %v400, %v416
    %420 = vst [vmem:[%s2] sm:$0x3] %v419
    // Predicated region
    $region14: #{lstm_tele_forward.1} parent=1 // pred_check
      _
    $region15: #{lstm_tele_forward.1} parent=1 // pred_check_branch
      %422 = sbr.rel (0) target = $region17
    $region16: #{lstm_tele_forward.1} parent=1 // pred_region
      _
    $region17: #{lstm_tele_forward.1} parent=1 // pred_fallthru
      _
    // Predicated region
    $region18: #{lstm_tele_forward.1} parent=1 // pred_check
      _
    $region19: #{lstm_tele_forward.1} parent=1 // pred_check_branch
      %424 = sbr.rel (0) target = $region21
    $region20: #{lstm_tele_forward.1} parent=1 // pred_region
      _
    $region21: #{lstm_tele_forward.1} parent=1 // pred_fallthru
      _
    %425 = vsyncpa [#allocation3], 1

</llo_original>
